<compile_context>
chip_gen: v5e
topology: v5e:2x2
jax: 0.10.0
libtpu: 0.0.40
codegen_flags: <defaults>
</compile_context>

<pallas_src>
import functools

import jax
import jax.numpy as jnp
from jax.experimental import pallas as pl
from jax.experimental.pallas import tpu as pltpu

EPS = 1e-5


# ---------------------------------------------------------------------------
# generation-aware budgets
# ---------------------------------------------------------------------------
def _vmem_budgets():
    cap = 128 << 20
    try:
        cap = int(getattr(pltpu.get_tpu_info(), "vmem_capacity_bytes", cap))
    except Exception:
        pass
    if cap <= (64 << 20):                 # v7x: 64 MiB VMEM per TensorCore
        return 4 << 20, 48 << 20
    return 8 << 20, 64 << 20              # v5e / v6e: 128 MiB physical VMEM


# ---------------------------------------------------------------------------
# tiling helpers
# ---------------------------------------------------------------------------
def _sublane_pack(dtype):
    return {4: 8, 2: 16, 1: 32}.get(jnp.dtype(dtype).itemsize, 8)


def _choose_c_tile(C, dtype):
    base = _sublane_pack(dtype)
    return base if C % base == 0 else C       # full-dim block is always legal


def _choose_l_tile(L, c_tile, itemsize, max_block_bytes):
    if L % 128 != 0:
        return L                              # full-dim block is always legal
    cap = max(128, (max_block_bytes // (c_tile * itemsize)) // 128 * 128)
    t = min(L, cap)
    t -= t % 128
    while t >= 128:
        if L % t == 0:
            return t
        t -= 128
    return L


# ---------------------------------------------------------------------------
# fused single-visit kernel (small/medium activations): stats + normalize
# ---------------------------------------------------------------------------
def _fused_kernel(x_ref, gain_ref, bias_ref, o_ref, *, eps, count):
    # x_ref/o_ref: (N, c_tile, L); gain_ref/bias_ref: (c_tile, 1)
    x = x_ref[...].astype(jnp.float32)
    s = jnp.sum(jnp.sum(x, axis=2, keepdims=True), axis=0, keepdims=True)
    mean = s * (1.0 / count)                                # (1, c_tile, 1)
    d = x - mean
    v = jnp.sum(jnp.sum(d * d, axis=2, keepdims=True), axis=0, keepdims=True)
    var = v * (1.0 / count)                                 # centered: no cancellation
    scale = gain_ref[...][None] * jax.lax.rsqrt(var + eps)  # (1, c_tile, 1)
    shift = bias_ref[...][None] - mean * scale
    o_ref[...] = (x * scale + shift).astype(o_ref.dtype)


# ---------------------------------------------------------------------------
# pass 1: per-channel sum / sum-of-squares (split axis for v7x megacore)
# ---------------------------------------------------------------------------
def _stats_kernel(x_ref, sum_ref, sq_ref):
    # x_ref: (1, c_tile, l_tile); sum_ref/sq_ref: (1, c_tile, 1) resident accums
    ni = pl.program_id(2)
    li = pl.program_id(3)

    @pl.when((ni == 0) & (li == 0))
    def _():
        sum_ref[...] = jnp.zeros_like(sum_ref)
        sq_ref[...] = jnp.zeros_like(sq_ref)

    x = x_ref[0].astype(jnp.float32)          # (c_tile, l_tile), f32 accumulate
    sum_ref[...] += jnp.sum(x, axis=1, keepdims=True)[None]
    sq_ref[...] += jnp.sum(x * x, axis=1, keepdims=True)[None]


# ---------------------------------------------------------------------------
# pass 2: fused normalize  out = x * scale + shift
# ---------------------------------------------------------------------------
def _norm_kernel(x_ref, scale_ref, shift_ref, o_ref, *, compute_dtype):
    # x_ref/o_ref: (1, c_tile, l_tile); scale_ref/shift_ref: (c_tile, 1)
    x = x_ref[0].astype(compute_dtype)
    scale = scale_ref[...].astype(compute_dtype)
    shift = shift_ref[...].astype(compute_dtype)
    o_ref[0] = (x * scale + shift).astype(o_ref.dtype)


# ---------------------------------------------------------------------------
# wrapper
# ---------------------------------------------------------------------------
def bn3d_forward(x, gain, bias, *, eps=EPS, max_block_bytes=None,
                 vmem_limit_bytes=None, force_two_pass=False):
    """x: (N, C, D, H, W) NCDHW; gain/bias: (C,). Returns (N, C, D, H, W)."""
    N, C, D, H, W = x.shape
    L = D * H * W
    itemsize = jnp.dtype(x.dtype).itemsize

    auto_block, auto_vmem = _vmem_budgets()
    if max_block_bytes is None:
        max_block_bytes = auto_block
    if vmem_limit_bytes is None:
        vmem_limit_bytes = auto_vmem

    c_tile = _choose_c_tile(C, x.dtype)
    c_tiles = C // c_tile
    cnt = float(N * L)

    gain_c = gain.reshape(C, 1).astype(jnp.float32)
    bias_c = bias.reshape(C, 1).astype(jnp.float32)
    xr = x.reshape(N, C, L)                   # free reshape, no transpose

    # ---- fused single-visit fast path (HBM traffic 3x -> 2x) --------------
    fused_block_bytes = N * c_tile * L * itemsize
    if (not force_two_pass) and fused_block_bytes <= vmem_limit_bytes // 8:
        fused_cost = pl.CostEstimate(
            flops=7 * N * C * L, transcendentals=C,
            bytes_accessed=2 * N * C * L * itemsize + 2 * C * 4)
        out = pl.pallas_call(
            functools.partial(_fused_kernel, eps=float(eps), count=cnt),
            out_shape=jax.ShapeDtypeStruct((N, C, L), x.dtype),
            grid_spec=pltpu.PrefetchScalarGridSpec(
                num_scalar_prefetch=0,
                grid=(c_tiles,),
                in_specs=[pl.BlockSpec((N, c_tile, L), lambda ci: (0, ci, 0)),
                          pl.BlockSpec((c_tile, 1), lambda ci: (ci, 0)),
                          pl.BlockSpec((c_tile, 1), lambda ci: (ci, 0))],
                out_specs=pl.BlockSpec((N, c_tile, L), lambda ci: (0, ci, 0)),
            ),
            compiler_params=pltpu.CompilerParams(
                dimension_semantics=("parallel",),
                vmem_limit_bytes=vmem_limit_bytes),
            cost_estimate=fused_cost,
        )(xr, gain_c, bias_c)
        return out.reshape(N, C, D, H, W)

    # ---- two-pass path -----------------------------------------------------
    # Guard the unaligned-L fallback: pad L to a lane multiple when a full-L
    # block would blow the block budget (zero pad is stats-neutral; the true
    # count N*L is used below).
    L_eff, pad = L, 0
    if L % 128 != 0 and c_tile * L * itemsize > max_block_bytes:
        pad = (-L) % 128
        L_eff = L + pad
        xr = jnp.pad(xr, ((0, 0), (0, 0), (0, pad)))

    l_tile = _choose_l_tile(L_eff, c_tile, itemsize, max_block_bytes)
    l_tiles = L_eff // l_tile

    # Leading split axis so pass 1 shards across v7x's 2 TensorCores even when
    # c_tiles == 1 (harmless on single-TC v5e/v6e: tiny extra output).
    n_splits = 2 if (N >= 2 and N % 2 == 0 and c_tiles % 2 == 1) else 1
    n_per = N // n_splits

    stats_cost = pl.CostEstimate(
        flops=3 * N * C * L_eff, transcendentals=0,
        bytes_accessed=N * C * L_eff * itemsize + 2 * n_splits * C * 4)
    s, sq = pl.pallas_call(
        _stats_kernel,
        out_shape=(jax.ShapeDtypeStruct((n_splits, C, 1), jnp.float32),
                   jax.ShapeDtypeStruct((n_splits, C, 1), jnp.float32)),
        grid_spec=pltpu.PrefetchScalarGridSpec(
            num_scalar_prefetch=0,
            grid=(n_splits, c_tiles, n_per, l_tiles),
            in_specs=[pl.BlockSpec(
                (1, c_tile, l_tile),
                lambda si, ci, ni, li: (si * n_per + ni, ci, li))],
            out_specs=(pl.BlockSpec((1, c_tile, 1),
                                    lambda si, ci, ni, li: (si, ci, 0)),
                       pl.BlockSpec((1, c_tile, 1),
                                    lambda si, ci, ni, li: (si, ci, 0))),
        ),
        compiler_params=pltpu.CompilerParams(
            dimension_semantics=("parallel", "parallel", "arbitrary", "arbitrary"),
            vmem_limit_bytes=vmem_limit_bytes),
        cost_estimate=stats_cost,
    )(xr)

    # ---- fold stats into per-channel scale/shift ((C,)-sized math) -------
    s = jnp.sum(s, axis=0)                              # (C, 1)
    sq = jnp.sum(sq, axis=0)                            # (C, 1)
    mean = s / cnt
    # E[x^2] - E[x]^2 in f32; clamp negative round-off. (Tolerance documented.)
    var = jnp.maximum(sq / cnt - mean * mean, 0.0)
    scale = gain_c * jax.lax.rsqrt(var + eps)
    shift = bias_c - mean * scale

    # bf16 inputs: keep the affine in bf16 (native VPU on v6e/v7x).
    # TODO(synk): force float32 compute on v5e (no bf16 VPU) if targeted.
    compute_dtype = jnp.float32 if itemsize >= 4 else x.dtype

    norm_cost = pl.CostEstimate(
        flops=2 * N * C * L_eff, transcendentals=0,
        bytes_accessed=2 * N * C * L_eff * itemsize + 2 * C * 4)
    out = pl.pallas_call(
        functools.partial(_norm_kernel, compute_dtype=compute_dtype),
        out_shape=jax.ShapeDtypeStruct((N, C, L_eff), x.dtype),
        grid_spec=pltpu.PrefetchScalarGridSpec(
            num_scalar_prefetch=0,
            grid=(N, c_tiles, l_tiles),
            in_specs=[pl.BlockSpec((1, c_tile, l_tile),
                                   lambda ni, ci, li: (ni, ci, li)),
                      pl.BlockSpec((c_tile, 1), lambda ni, ci, li: (ci, 0)),
                      pl.BlockSpec((c_tile, 1), lambda ni, ci, li: (ci, 0))],
            out_specs=pl.BlockSpec((1, c_tile, l_tile),
                                   lambda ni, ci, li: (ni, ci, li)),
        ),
        compiler_params=pltpu.CompilerParams(
            dimension_semantics=("parallel", "parallel", "parallel"),
            vmem_limit_bytes=vmem_limit_bytes),
        cost_estimate=norm_cost,
    )(xr, scale, shift)

    if pad:
        out = out[:, :, :L]
    return out.reshape(N, C, D, H, W)


# ---------------------------------------------------------------------------
# pure-JAX reference (F.batch_norm, training mode, biased variance)
# ---------------------------------------------------------------------------
def bn3d_reference(x, gain, bias, eps=EPS):
    mean = jnp.mean(x, axis=(0, 2, 3, 4), keepdims=True)
    var = jnp.mean((x - mean) ** 2, axis=(0, 2, 3, 4), keepdims=True)
    g = gain.reshape(1, -1, 1, 1, 1)
    b = bias.reshape(1, -1, 1, 1, 1)
    return (x - mean) / jnp.sqrt(var + eps) * g + b


if __name__ == "__main__":
    key = jax.random.PRNGKey(0)
    kx, kg, kb, kx2, kx3 = jax.random.split(key, 5)

    # --- test 1: module-sized toy shape -> fused single-visit path ---------
    N, C, D, H, W = 2, 8, 4, 8, 8
    x = jax.random.normal(kx, (N, C, D, H, W), dtype=jnp.float32)
    gain = 1.0 + 0.1 * jax.random.normal(kg, (C,), dtype=jnp.float32)
    bias = 0.1 * jax.random.normal(kb, (C,), dtype=jnp.float32)

    out = jax.block_until_ready(bn3d_forward(x, gain, bias))
    ref = bn3d_reference(x, gain, bias)
    assert out.shape == (N, C, D, H, W)
    assert jnp.allclose(out, ref, atol=1e-4, rtol=1e-4)

    # --- test 2: two-pass path with multiple channel & L tiles -------------
    N2, C2, D2, H2, W2 = 2, 16, 4, 8, 8
    x2 = jax.random.normal(kx2, (N2, C2, D2, H2, W2), dtype=jnp.float32)
    gain2 = 1.0 + 0.05 * jax.random.normal(kg, (C2,), dtype=jnp.float32)
    bias2 = 0.05 * jax.random.normal(kb, (C2,), dtype=jnp.float32)
    # tiny block budget -> l_tile=128, l_tiles=2, c_tiles=2 (accumulator path)
    out2 = jax.block_until_ready(
        bn3d_forward(x2, gain2, bias2, force_two_pass=True,
                     max_block_bytes=8 * 128 * 4))
    ref2 = bn3d_reference(x2, gain2, bias2)
    assert out2.shape == (N2, C2, D2, H2, W2)
    assert jnp.allclose(out2, ref2, atol=1e-4, rtol=1e-4)

    # --- test 3: two-pass, c_tiles==1 (N-split axis) + unaligned L ----------
    N3, C3, D3, H3, W3 = 4, 8, 3, 5, 7
    x3 = jax.random.normal(kx3, (N3, C3, D3, H3, W3), dtype=jnp.float32)
    gain3 = jnp.ones((C3,), dtype=jnp.float32)
    bias3 = jnp.zeros((C3,), dtype=jnp.float32)
    out3 = jax.block_until_ready(
        bn3d_forward(x3, gain3, bias3, force_two_pass=True))
    ref3 = bn3d_reference(x3, gain3, bias3)
    assert out3.shape == (N3, C3, D3, H3, W3)
    assert jnp.allclose(out3, ref3, atol=1e-4, rtol=1e-4)

    print("KERNEL_OK")
</pallas_src>

<mosaic_0001>
module attributes {stable_mosaic.version = 11 : i64} {
  func.func @_fused_kernel(%arg0: i32, %arg1: memref<2x8x256xf32, #tpu.memory_space<vmem>>, %arg2: memref<8x1xf32, #tpu.memory_space<vmem>>, %arg3: memref<8x1xf32, #tpu.memory_space<vmem>>, %arg4: memref<2x8x256xf32, #tpu.memory_space<vmem>>) attributes {dimension_semantics = [#tpu.dimension_semantics<parallel>], iteration_bounds = array<i64: 1>, scalar_prefetch = 0 : i64, scratch_operands = 0 : i64, tpu.core_type = #tpu.core_type<tc>, window_params = [{transform_indices = @transform_0, window_bounds = array<i64: 2, 8, 256>}, {transform_indices = @transform_1, window_bounds = array<i64: 8, 1>}, {transform_indices = @transform_2, window_bounds = array<i64: 8, 1>}, {transform_indices = @transform_3, window_bounds = array<i64: 2, 8, 256>}]} {
    %c0 = arith.constant 0 : index
    %c0_0 = arith.constant 0 : index
    %c0_1 = arith.constant 0 : index
    %0 = vector.load %arg1[%c0, %c0_0, %c0_1] : memref<2x8x256xf32, #tpu.memory_space<vmem>>, vector<2x8x256xf32>
    %cst = arith.constant dense<0.000000e+00> : vector<2x8xf32>
    %1 = vector.multi_reduction <add>, %0, %cst [2] : vector<2x8x256xf32> to vector<2x8xf32>
    %2 = vector.shape_cast %1 : vector<2x8xf32> to vector<2x8x1xf32>
    %cst_2 = arith.constant dense<0.000000e+00> : vector<8x1xf32>
    %3 = vector.multi_reduction <add>, %2, %cst_2 [0] : vector<2x8x1xf32> to vector<8x1xf32>
    %4 = vector.shape_cast %3 : vector<8x1xf32> to vector<1x8x1xf32>
    %cst_3 = arith.constant 0.001953125 : f32
    %5 = vector.broadcast %cst_3 : f32 to vector<1x8x1xf32>
    %6 = arith.mulf %4, %5 : vector<1x8x1xf32>
    %7 = vector.broadcast %6 : vector<1x8x1xf32> to vector<2x8x256xf32>
    %8 = arith.subf %0, %7 : vector<2x8x256xf32>
    %9 = arith.mulf %8, %8 : vector<2x8x256xf32>
    %cst_4 = arith.constant dense<0.000000e+00> : vector<2x8xf32>
    %10 = vector.multi_reduction <add>, %9, %cst_4 [2] : vector<2x8x256xf32> to vector<2x8xf32>
    %11 = vector.shape_cast %10 : vector<2x8xf32> to vector<2x8x1xf32>
    %cst_5 = arith.constant dense<0.000000e+00> : vector<8x1xf32>
    %12 = vector.multi_reduction <add>, %11, %cst_5 [0] : vector<2x8x1xf32> to vector<8x1xf32>
    %13 = vector.shape_cast %12 : vector<8x1xf32> to vector<1x8x1xf32>
    %cst_6 = arith.constant 0.001953125 : f32
    %14 = vector.broadcast %cst_6 : f32 to vector<1x8x1xf32>
    %15 = arith.mulf %13, %14 : vector<1x8x1xf32>
    %c0_7 = arith.constant 0 : index
    %c0_8 = arith.constant 0 : index
    %16 = vector.load %arg2[%c0_7, %c0_8] : memref<8x1xf32, #tpu.memory_space<vmem>>, vector<8x1xf32>
    %17 = vector.shape_cast %16 : vector<8x1xf32> to vector<1x8x1xf32>
    %cst_9 = arith.constant 9.99999974E-6 : f32
    %18 = vector.broadcast %cst_9 : f32 to vector<1x8x1xf32>
    %19 = arith.addf %15, %18 : vector<1x8x1xf32>
    %20 = math.rsqrt %19 : vector<1x8x1xf32>
    %21 = arith.mulf %17, %20 : vector<1x8x1xf32>
    %c0_10 = arith.constant 0 : index
    %c0_11 = arith.constant 0 : index
    %22 = vector.load %arg3[%c0_10, %c0_11] : memref<8x1xf32, #tpu.memory_space<vmem>>, vector<8x1xf32>
    %23 = vector.shape_cast %22 : vector<8x1xf32> to vector<1x8x1xf32>
    %24 = arith.mulf %6, %21 : vector<1x8x1xf32>
    %25 = arith.subf %23, %24 : vector<1x8x1xf32>
    %26 = vector.broadcast %21 : vector<1x8x1xf32> to vector<2x8x256xf32>
    %27 = arith.mulf %0, %26 : vector<2x8x256xf32>
    %28 = vector.broadcast %25 : vector<1x8x1xf32> to vector<2x8x256xf32>
    %29 = arith.addf %27, %28 : vector<2x8x256xf32>
    %c0_12 = arith.constant 0 : index
    %c0_13 = arith.constant 0 : index
    %c0_14 = arith.constant 0 : index
    %30 = vector.load %arg4[%c0_12, %c0_13, %c0_14] : memref<2x8x256xf32, #tpu.memory_space<vmem>>, vector<2x8x256xf32>
    tpu.vector_store %arg4[%c0_12, %c0_13, %c0_14], %29 {strides = array<i32>} : memref<2x8x256xf32, #tpu.memory_space<vmem>>, vector<2x8x256xf32>,
    return
  }
  func.func @transform_0(%arg0: i32) -> (i32, i32, i32) {
    %c0_i32 = arith.constant 0 : i32
    %c0_i32_0 = arith.constant 0 : i32
    %c0_i32_1 = arith.constant 0 : i32
    return %c0_i32, %arg0, %c0_i32_0 : i32, i32, i32
  }
  func.func @transform_1(%arg0: i32) -> (i32, i32) {
    %c0_i32 = arith.constant 0 : i32
    %c0_i32_0 = arith.constant 0 : i32
    return %arg0, %c0_i32 : i32, i32
  }
  func.func @transform_2(%arg0: i32) -> (i32, i32) {
    %c0_i32 = arith.constant 0 : i32
    %c0_i32_0 = arith.constant 0 : i32
    return %arg0, %c0_i32 : i32, i32
  }
  func.func @transform_3(%arg0: i32) -> (i32, i32, i32) {
    %c0_i32 = arith.constant 0 : i32
    %c0_i32_0 = arith.constant 0 : i32
    %c0_i32_1 = arith.constant 0 : i32
    return %c0_i32, %arg0, %c0_i32_0 : i32, i32, i32
  }
}

</mosaic_0001>

<llo_original>
// kernel: tpu_custom_call.1
$region0: #{tpu_custom_call.1}
  #allocation0 [shape = 'u32[]', space=smem, size = 0x4, offset = 0x4, fixed_abs, tag = 'smem constant byte address 0x4 - core index']
  #allocation1 [shape = 'u32[72,128]{1,0:T(1,128)}', space=vmem, size = 0x9000, scoped, tag = 'internal scratch']
  %s0 = inlined_call_operand.hbm [shape: f32[2,8,256], index: 0, kind: input, shape index: {}]
  %s1 = inlined_call_operand.vmem [shape: f32[8,1], index: 1, kind: input, shape index: {}]
  %s2 = inlined_call_operand.vmem [shape: f32[8,1], index: 2, kind: input, shape index: {}]
  %s3 = inlined_call_operand.hbm [shape: f32[2,8,256], index: 3, kind: output, shape index: {}]
  %s4 = sld [smem:[#allocation0]]
  $region26: #{tpu_custom_call.1} parent=0
    _
  %s6 = ssub.s32 1, %s4
  %s7 = scalar_select 0, %s6, %s4
  $region1: #{tpu_custom_call.1} parent=0
    #allocation2 [shape = 'u8[16384]{0}', space=vmem, size = 0x4000, scoped, tag = 'input window, operand 0, single buffered']
    #allocation3 [shape = 's32[1]{0}', space=sflag, size = 0x4, scoped, tag = 'scoped memory for tpu_custom_call.1']
    #allocation4 [shape = 's32[1]{0}', space=sflag, size = 0x4, scoped, tag = 'scoped memory for tpu_custom_call.1']
    #allocation5 [shape = 'u8[16384]{0}', space=vmem, size = 0x4000, scoped, tag = 'output window, operand 0, single buffered']
    %8 = vsyncpa [#allocation3], 0
    %9 = vsyncpa [#allocation4], 0
    // Predicated region
    $region2: #{tpu_custom_call.1} parent=1 // pred_check
      _
    $region3: #{tpu_custom_call.1} parent=1 // pred_check_branch
      %11 = sbr.rel (0) target = $region5
    $region4: #{tpu_custom_call.1} parent=1 // pred_region
      %13 = vsyncadd [#allocation3], 0
      %s14 = sshll.u32 %s0, 4
      %s15 = int_to_ptr.hbm [resolvable:$true] %s14
      %s16 = sshll.u32 [#allocation2], 4
      %s17 = int_to_ptr.vmem [resolvable:$true] %s16
      %22 = dma.hbm_to_vmem [thread:$0]  %s15, 512, %s17, [#allocation3], 256, 256, 16
    $region5: #{tpu_custom_call.1} parent=1 // pred_fallthru
      _
    // Predicated region
    $region6: #{tpu_custom_call.1} parent=1 // pred_check
      _
    $region7: #{tpu_custom_call.1} parent=1 // pred_check_branch
      %24 = sbr.rel (0) target = $region9
    $region8: #{tpu_custom_call.1} parent=1 // pred_region
      _
    $region9: #{tpu_custom_call.1} parent=1 // pred_fallthru
      _
    // Predicated region
    $region10: #{tpu_custom_call.1} parent=1 // pred_check
      _
    $region11: #{tpu_custom_call.1} parent=1 // pred_check_branch
      %26 = sbr.rel (0) target = $region13
    $region12: #{tpu_custom_call.1} parent=1 // pred_region
      _
    $region13: #{tpu_custom_call.1} parent=1 // pred_fallthru
      _
    // Predicated region
    $region14: #{tpu_custom_call.1} parent=1 // pred_check
      _
    $region15: #{tpu_custom_call.1} parent=1 // pred_check_branch
      %28 = sbr.rel (0) target = $region17
    $region16: #{tpu_custom_call.1} parent=1 // pred_region
      %30 = dma.done [#allocation3], 512
    $region17: #{tpu_custom_call.1} parent=1 // pred_fallthru
      _
    %v31 = vld [vmem:[#allocation2] sm:$0xff]
    %v32 = vld [vmem:[#allocation2 + $0x8] sm:$0xff]
    %v33 = vld [vmem:[#allocation2 + $0x10] sm:$0xff]
    %v34 = vld [vmem:[#allocation2 + $0x18] sm:$0xff]
    %v35 = vadd.f32 %v31, %v32
    %36 = vadd.xlane.f32.xlu0 %v35
    %v37 = vpop.xlane.xlu0 %36
    %v38 = vadd.f32 %v33, %v34
    %39 = vadd.xlane.f32.xlu0 %v38
    %v40 = vpop.xlane.xlu0 %39
    %v41 = vadd.f32 %v37, %v40
    %v42 = vmul.f32 %v41, 0.001953125
    %v43 = vsub.f32 %v31, %v42
    %v44 = vsub.f32 %v32, %v42
    %v45 = vsub.f32 %v33, %v42
    %v46 = vsub.f32 %v34, %v42
    %v47 = vmul.f32 %v43, %v43
    %v48 = vmul.f32 %v44, %v44
    %v49 = vmul.f32 %v45, %v45
    %v50 = vmul.f32 %v46, %v46
    %v51 = vadd.f32 %v47, %v48
    %52 = vadd.xlane.f32.xlu0 %v51
    %v53 = vpop.xlane.xlu0 %52
    %v54 = vadd.f32 %v49, %v50
    %55 = vadd.xlane.f32.xlu0 %v54
    %v56 = vpop.xlane.xlu0 %55
    %v57 = vadd.f32 %v53, %v56
    %v58 = vmul.f32 %v57, 0.001953125
    %v59 = vld [vmem:[%s1] sm:$0xff]
    %v60 = vadd.f32 %v58, 1e-05
    %v61 = vrsqrt.pop %v60
    %v62 = vmul.f32 %v61, %v60
    %v63 = vmul.f32 %v62, %v61
    %v64 = vmul.f32 0.5, %v63
    %v65 = vsub.f32 1.5, %v64
    %v66 = vmul.f32 %v61, %v65
    %vm67 = vweird.f32 %v60
    %vm68 = vweird.f32 %v61
    %vm69 = vmor %vm67, %vm68
    %v70 = vsel %vm69, %v61, %v66
    %v71 = vmul.f32 %v59, %v70
    %v72 = vld [vmem:[%s2] sm:$0xff]
    %v73 = vmul.f32 %v42, %v71
    %v74 = vsub.f32 %v72, %v73
    %76 = vset.pattern.permute.xlu0 0
    %77 = vperm.xlu0 %76, %v71
    %v78 = vpop.permute.xlu0 %77
    %v80 = vmul.f32 %v31, %v78
    %v81 = vmul.f32 %v32, %v78
    %v82 = vmul.f32 %v33, %v78
    %v83 = vmul.f32 %v34, %v78
    %85 = vset.pattern.permute.xlu0 0
    %86 = vperm.xlu0 %85, %v74
    %v87 = vpop.permute.xlu0 %86
    %v89 = vadd.f32 %v80, %v87
    %v90 = vadd.f32 %v81, %v87
    %v91 = vadd.f32 %v82, %v87
    %v92 = vadd.f32 %v83, %v87
    %93 = vst [vmem:[#allocation5] sm:$0xff] %v89
    %94 = vst [vmem:[#allocation5 + $0x8] sm:$0xff] %v90
    %95 = vst [vmem:[#allocation5 + $0x10] sm:$0xff] %v91
    %96 = vst [vmem:[#allocation5 + $0x18] sm:$0xff] %v92
    // Predicated region
    $region18: #{tpu_custom_call.1} parent=1 // pred_check
      _
    $region19: #{tpu_custom_call.1} parent=1 // pred_check_branch
      %98 = sbr.rel (0) target = $region21
    $region20: #{tpu_custom_call.1} parent=1 // pred_region
      %100 = vsyncadd [#allocation4], 0
      %s101 = sshll.u32 [#allocation5], 4
      %s102 = int_to_ptr.vmem [resolvable:$true] %s101
      %s103 = sshll.u32 %s3, 4
      %s104 = int_to_ptr.hbm [resolvable:$true] %s103
      %109 = dma.vmem_to_hbm [thread:$0]  %s102, 512, %s104, [#allocation4], 256, 256, 16
    $region21: #{tpu_custom_call.1} parent=1 // pred_fallthru
      _
    // Predicated region
    $region22: #{tpu_custom_call.1} parent=1 // pred_check
      _
    $region23: #{tpu_custom_call.1} parent=1 // pred_check_branch
      %111 = sbr.rel (0) target = $region25
    $region24: #{tpu_custom_call.1} parent=1 // pred_region
      %113 = dma.done [#allocation4], 512
    $region25: #{tpu_custom_call.1} parent=1 // pred_fallthru
      _
    %114 = vsyncpa [#allocation3], 1
    %115 = vsyncpa [#allocation4], 1

</llo_original>
